<compile_context>
chip_gen: v7x
topology: tpu7x:2x2x1
jax: 0.10.0
libtpu: 0.0.40
codegen_flags: <defaults>
</compile_context>

<pallas_src>
import functools

import jax
import jax.numpy as jnp
from jax.experimental import pallas as pl
from jax.experimental.pallas import tpu as pltpu


_LANE_CANDIDATES = (512, 256, 128)


def _round_up(x, m):
    return ((x + m - 1) // m) * m


def _launch_config():
    """Generation-aware (splits, block_bytes, vmem_limit_bytes)."""
    try:
        kind = jax.devices()[0].device_kind.lower()
    except Exception:
        kind = ""
    if "v7" in kind:
        # 2 TensorCores/chip, 64 MiB VMEM per TC (32 MiB scoped): 4 MiB blocks,
        # 3 inputs x 2 buffers x 4 MiB + 16 KiB acc fits the 32 MiB limit.
        return 2, 4 * 1024 * 1024, 32 * 1024 * 1024
    if "v5e" in kind or "v5 lite" in kind or "v6" in kind:
        # Single TC, 128 MiB physical VMEM: 8 MiB blocks amortize per-step overhead.
        return 1, 8 * 1024 * 1024, 64 * 1024 * 1024
    # Unknown / older generations: stay well inside the default scoped VMEM limit.
    return 1, 1 * 1024 * 1024, None


def _bce_accumulate(raw_ref, mask_ref, tgt_ref, acc_ref, *, valid_rows, block_rows, lanes):
    """acc += sum-over-sublane-groups of  mask * (t*log(p) + (1-t)*log(1-p))  (NOT negated)."""
    x = raw_ref[...].astype(jnp.float32)
    m = mask_ref[...].astype(jnp.float32)
    t = tgt_ref[...].astype(jnp.float32)

    # torch.nn.Sigmoid + torch.nn.BCELoss semantics: each log term clamped at -100,
    # including saturation (for |x| >~ 17 the f32 sigmoid rounds to 0/1 -> clamp -100).
    p = 1.0 / (1.0 + jnp.exp(-x))
    log_p = jnp.maximum(jnp.log(p), jnp.float32(-100.0))
    log_1mp = jnp.maximum(jnp.log(1.0 - p), jnp.float32(-100.0))
    # t*log_p + (1-t)*log_1mp with one fewer multiply; negation folded into final scale.
    ll = log_1mp + t * (log_p - log_1mp)
    contrib = m * ll

    if valid_rows < block_rows:
        # Ragged last block: rows >= valid_rows of the VMEM window are undefined
        # (partial DMA) -> zero them before accumulating.
        row = jax.lax.broadcasted_iota(jnp.int32, (block_rows, lanes), 0)
        contrib = jnp.where(row < valid_rows, contrib, jnp.float32(0.0))

    if block_rows > 8 and block_rows % 8 == 0:
        # Pure-VPU tree reduce over sublane groups into the small (8, lanes) accumulator.
        contrib = jnp.sum(contrib.reshape(block_rows // 8, 8, lanes), axis=0)

    acc_ref[...] += contrib


def _tsp_loss_kernel(raw_ref, mask_ref, tgt_ref, out_ref, acc_ref, *,
                     steps, num_blocks, block_rows, tail_rows, lanes,
                     has_phantom, neg_inv_count):
    s = pl.program_id(0)   # split axis: "parallel" (2 TCs on v7x, size 1 otherwise)
    j = pl.program_id(1)   # step within split: "arbitrary" (reduction axis)

    @pl.when(j == 0)
    def _():
        acc_ref[...] = jnp.zeros_like(acc_ref)

    accumulate = functools.partial(
        _bce_accumulate, raw_ref, mask_ref, tgt_ref, acc_ref,
        block_rows=block_rows, lanes=lanes)

    has_ragged = tail_rows != block_rows          # static
    blk = s * steps + j                           # global block index

    if has_ragged or has_phantom:
        is_tail = blk == (num_blocks - 1)
        if has_ragged:
            main_cond = jnp.logical_not(is_tail)
            if has_phantom:
                main_cond = jnp.logical_and(main_cond, blk < num_blocks)

            @pl.when(main_cond)
            def _():
                accumulate(valid_rows=block_rows)

            @pl.when(is_tail)
            def _():
                accumulate(valid_rows=tail_rows)
        else:
            @pl.when(blk < num_blocks)
            def _():
                accumulate(valid_rows=block_rows)
    else:
        accumulate(valid_rows=block_rows)

    @pl.when(j == steps - 1)
    def _():
        out_ref[0, 0] = jnp.sum(acc_ref[...]) * jnp.float32(neg_inv_count)


def tsp_loss(raw_scores, mask, target, *, block_bytes=None):
    """mean(mask * BCELoss(sigmoid(raw_scores), target)) over all (bs, n, n) elements."""
    assert raw_scores.shape == mask.shape == target.shape
    total = 1
    for d in raw_scores.shape:
        total *= int(d)
    assert total > 0

    splits, cfg_block_bytes, vmem_limit = _launch_config()
    if block_bytes is None:
        block_bytes = cfg_block_bytes

    inv_count = 1.0 / float(total)

    # Lane-dense layout: widest lane count that divides `total` -> pure reshape view.
    lanes = next((c for c in _LANE_CANDIDATES if total % c == 0), None)

    if lanes is None:
        # Rare fallback: element count not a multiple of 128.  Minimal zero-pad
        # (padded mask == 0, so padded elements contribute nothing to the sum).
        lanes = 128
        padded_total = _round_up(total, lanes)
        pad = padded_total - total
        rows = padded_total // lanes

        def _prep(a):
            return jnp.pad(a.reshape(-1), (0, pad)).reshape(rows, lanes)

        raw2d, mask2d, tgt2d = _prep(raw_scores), _prep(mask), _prep(target)
    else:
        rows = total // lanes
        raw2d = raw_scores.reshape(rows, lanes)
        mask2d = mask.reshape(rows, lanes)
        tgt2d = target.reshape(rows, lanes)

    # Block rows from a per-block byte budget (f32 worst case), multiple of 8 sublanes;
    # a single full-extent block if everything fits (full dims are always legal).
    cap = max(8, (block_bytes // (lanes * 4)) // 8 * 8)
    block_rows = rows if rows <= cap else cap
    num_blocks = (rows + block_rows - 1) // block_rows
    tail_rows = rows - (num_blocks - 1) * block_rows

    if splits > num_blocks:
        splits = 1
    steps = (num_blocks + splits - 1) // splits
    has_phantom = splits * steps != num_blocks     # only possible when splits == 2

    acc_rows = 8 if block_rows % 8 == 0 else block_rows

    if has_phantom:
        def _blk(s, j):
            # Clamp the (at most one) phantom step to the last real block; the kernel
            # skips its accumulation via `blk < num_blocks`.
            return jnp.minimum(s * steps + j, num_blocks - 1)
    else:
        def _blk(s, j):
            return s * steps + j

    in_spec = pl.BlockSpec((block_rows, lanes), lambda s, j: (_blk(s, j), 0))
    out_spec = pl.BlockSpec((1, 1), lambda s, j: (s, 0),
                            memory_space=pltpu.MemorySpace.SMEM)

    kernel = functools.partial(
        _tsp_loss_kernel,
        steps=steps, num_blocks=num_blocks, block_rows=block_rows,
        tail_rows=tail_rows, lanes=lanes, has_phantom=has_phantom,
        neg_inv_count=-inv_count)

    cp_kwargs = dict(dimension_semantics=("parallel", "arbitrary"))
    if vmem_limit is not None:
        cp_kwargs["vmem_limit_bytes"] = vmem_limit

    bytes_accessed = total * (raw_scores.dtype.itemsize
                              + mask.dtype.itemsize
                              + target.dtype.itemsize) + splits * 4
    cost = pl.CostEstimate(flops=12 * total, transcendentals=3 * total,
                           bytes_accessed=bytes_accessed)

    partials = pl.pallas_call(
        kernel,
        out_shape=jax.ShapeDtypeStruct((splits, 1), jnp.float32),
        grid=(splits, steps),
        in_specs=[in_spec, in_spec, in_spec],
        out_specs=out_spec,
        scratch_shapes=[pltpu.VMEM((acc_rows, lanes), jnp.float32)],
        compiler_params=pltpu.CompilerParams(**cp_kwargs),
        cost_estimate=cost,
    )(raw2d, mask2d, tgt2d)

    # Per-split partials are already scaled by -1/count (negation folded in); add them.
    return jnp.sum(partials)


def _reference(raw_scores, mask, target):
    # torch.nn.Sigmoid + torch.nn.BCELoss(reduction='none') + full-tensor mean
    t = target.astype(jnp.float32)
    p = jax.nn.sigmoid(raw_scores.astype(jnp.float32))
    log_p = jnp.maximum(jnp.log(p), -100.0)
    log_1mp = jnp.maximum(jnp.log(1.0 - p), -100.0)
    bce = -(t * log_p + (1.0 - t) * log_1mp)
    return jnp.mean(mask.astype(jnp.float32) * bce)


if __name__ == "__main__":
    key = jax.random.PRNGKey(0)

    # (bs, n, forced block_bytes): default config plus two small forced-tiling configs
    # exercising the multi-step + ragged-tail path and the pad-fallback path.
    cases = [
        (2, 16, None),           # total=512: pure-view single-block path (main case)
        (2, 40, 16 * 128 * 4),   # total=3200 -> lanes=128, 16-row blocks: multi-step + ragged tail
        (3, 20, None),           # total=1200: not a multiple of 128 -> pad-fallback path
    ]
    for bs, n, blk_bytes in cases:
        key, k1, k2, k3 = jax.random.split(key, 4)
        raw_scores = jax.random.normal(k1, (bs, n, n), dtype=jnp.float32)
        target = (jax.random.uniform(k2, (bs, n, n)) > 0.5).astype(jnp.float32)
        mask = (jax.random.uniform(k3, (bs, n, n)) > 0.2).astype(jnp.float32)

        if blk_bytes is None:
            loss = tsp_loss(raw_scores, mask, target)
        else:
            loss = tsp_loss(raw_scores, mask, target, block_bytes=blk_bytes)
        jax.block_until_ready(loss)

        ref = _reference(raw_scores, mask, target)
        assert jnp.allclose(loss, ref, rtol=1e-5, atol=1e-5), (bs, n, loss, ref)

    print("KERNEL_OK")
</pallas_src>

<mosaic_0001>
module attributes {stable_mosaic.version = 11 : i64} {
  func.func @_tsp_loss_kernel(%arg0: i32, %arg1: i32, %arg2: memref<1x512xf32, #tpu.memory_space<vmem>>, %arg3: memref<1x512xf32, #tpu.memory_space<vmem>>, %arg4: memref<1x512xf32, #tpu.memory_space<vmem>>, %arg5: memref<1x1xf32, #tpu.memory_space<smem>>, %arg6: memref<1x512xf32, #tpu.memory_space<vmem>>) attributes {dimension_semantics = [#tpu.dimension_semantics<parallel>, #tpu.dimension_semantics<arbitrary>], iteration_bounds = array<i64: 1, 1>, scalar_prefetch = 0 : i64, scratch_operands = 1 : i64, tpu.core_type = #tpu.core_type<tc>, window_params = [{transform_indices = @transform_0, window_bounds = array<i64: 1, 512>}, {transform_indices = @transform_1, window_bounds = array<i64: 1, 512>}, {transform_indices = @transform_2, window_bounds = array<i64: 1, 512>}, {transform_indices = @transform_3, window_bounds = array<i64: 1, 1>}]} {
    %c0_i32 = arith.constant 0 : i32
    %0 = arith.cmpi eq, %arg1, %c0_i32 : i32
    %1 = arith.extui %0 : i1 to i32
    %c0_i32_0 = arith.constant 0 : i32
    %2 = arith.cmpi ne, %1, %c0_i32_0 : i32
    scf.if %2 {
      %cst_17 = arith.constant 0.000000e+00 : f32
      %31 = vector.broadcast %cst_17 : f32 to vector<1x512xf32>
      %c0_18 = arith.constant 0 : index
      %c0_19 = arith.constant 0 : index
      %32 = vector.load %arg6[%c0_18, %c0_19] : memref<1x512xf32, #tpu.memory_space<vmem>>, vector<1x512xf32>
      tpu.vector_store %arg6[%c0_18, %c0_19], %31 {strides = array<i32>} : memref<1x512xf32, #tpu.memory_space<vmem>>, vector<1x512xf32>,
    } else {
    }
    %c0 = arith.constant 0 : index
    %c0_1 = arith.constant 0 : index
    %3 = vector.load %arg2[%c0, %c0_1] : memref<1x512xf32, #tpu.memory_space<vmem>>, vector<1x512xf32>
    %c0_2 = arith.constant 0 : index
    %c0_3 = arith.constant 0 : index
    %4 = vector.load %arg3[%c0_2, %c0_3] : memref<1x512xf32, #tpu.memory_space<vmem>>, vector<1x512xf32>
    %c0_4 = arith.constant 0 : index
    %c0_5 = arith.constant 0 : index
    %5 = vector.load %arg4[%c0_4, %c0_5] : memref<1x512xf32, #tpu.memory_space<vmem>>, vector<1x512xf32>
    %cst = arith.constant 0.000000e+00 : f32
    %6 = vector.broadcast %cst : f32 to vector<1x512xf32>
    %7 = arith.subf %6, %3 : vector<1x512xf32>
    %8 = math.exp %7 : vector<1x512xf32>
    %cst_6 = arith.constant 1.000000e+00 : f32
    %9 = vector.broadcast %cst_6 : f32 to vector<1x512xf32>
    %10 = arith.addf %9, %8 : vector<1x512xf32>
    %cst_7 = arith.constant 1.000000e+00 : f32
    %11 = vector.broadcast %cst_7 : f32 to vector<1x512xf32>
    %12 = arith.divf %11, %10 : vector<1x512xf32>
    %13 = math.log %12 : vector<1x512xf32>
    %cst_8 = arith.constant -1.000000e+02 : f32
    %14 = vector.broadcast %cst_8 : f32 to vector<1x512xf32>
    %15 = arith.maximumf %13, %14 : vector<1x512xf32>
    %cst_9 = arith.constant 1.000000e+00 : f32
    %16 = vector.broadcast %cst_9 : f32 to vector<1x512xf32>
    %17 = arith.subf %16, %12 : vector<1x512xf32>
    %18 = math.log %17 : vector<1x512xf32>
    %cst_10 = arith.constant -1.000000e+02 : f32
    %19 = vector.broadcast %cst_10 : f32 to vector<1x512xf32>
    %20 = arith.maximumf %18, %19 : vector<1x512xf32>
    %21 = arith.subf %15, %20 : vector<1x512xf32>
    %22 = arith.mulf %5, %21 : vector<1x512xf32>
    %23 = arith.addf %20, %22 : vector<1x512xf32>
    %24 = arith.mulf %4, %23 : vector<1x512xf32>
    %c0_11 = arith.constant 0 : index
    %c0_12 = arith.constant 0 : index
    %25 = vector.load %arg6[%c0_11, %c0_12] : memref<1x512xf32, #tpu.memory_space<vmem>>, vector<1x512xf32>
    %26 = arith.addf %25, %24 : vector<1x512xf32>
    %c0_13 = arith.constant 0 : index
    %c0_14 = arith.constant 0 : index
    %27 = vector.load %arg6[%c0_13, %c0_14] : memref<1x512xf32, #tpu.memory_space<vmem>>, vector<1x512xf32>
    tpu.vector_store %arg6[%c0_13, %c0_14], %26 {strides = array<i32>} : memref<1x512xf32, #tpu.memory_space<vmem>>, vector<1x512xf32>,
    %c0_i32_15 = arith.constant 0 : i32
    %28 = arith.cmpi eq, %arg1, %c0_i32_15 : i32
    %29 = arith.extui %28 : i1 to i32
    %c0_i32_16 = arith.constant 0 : i32
    %30 = arith.cmpi ne, %29, %c0_i32_16 : i32
    scf.if %30 {
      %c0_17 = arith.constant 0 : index
      %c0_18 = arith.constant 0 : index
      %31 = vector.load %arg6[%c0_17, %c0_18] : memref<1x512xf32, #tpu.memory_space<vmem>>, vector<1x512xf32>
      %32 = vector.shape_cast %31 : vector<1x512xf32> to vector<1x1x512xf32>
      %cst_19 = arith.constant dense<0.000000e+00> : vector<1xf32>
      %33 = vector.multi_reduction <add>, %32, %cst_19 [1, 2] : vector<1x1x512xf32> to vector<1xf32>
      %34 = vector.shape_cast %33 : vector<1xf32> to vector<1x1x1xf32>
      %35 = vector.extract %34[0, 0, 0] : f32 from vector<1x1x1xf32>
      %cst_20 = arith.constant -0.001953125 : f32
      %36 = arith.mulf %35, %cst_20 : f32
      %c0_21 = arith.constant 0 : index
      %c0_22 = arith.constant 0 : index
      %37 = memref.load %arg5[%c0_21, %c0_22] : memref<1x1xf32, #tpu.memory_space<smem>>
      memref.store %36, %arg5[%c0_21, %c0_22] : memref<1x1xf32, #tpu.memory_space<smem>>
    } else {
    }
    return
  }
  func.func @transform_0(%arg0: i32, %arg1: i32) -> (i32, i32) {
    %c1_i32 = arith.constant 1 : i32
    %0 = arith.muli %arg0, %c1_i32 : i32
    %1 = arith.addi %0, %arg1 : i32
    %c0_i32 = arith.constant 0 : i32
    %c0_i32_0 = arith.constant 0 : i32
    return %1, %c0_i32 : i32, i32
  }
  func.func @transform_1(%arg0: i32, %arg1: i32) -> (i32, i32) {
    %c1_i32 = arith.constant 1 : i32
    %0 = arith.muli %arg0, %c1_i32 : i32
    %1 = arith.addi %0, %arg1 : i32
    %c0_i32 = arith.constant 0 : i32
    %c0_i32_0 = arith.constant 0 : i32
    return %1, %c0_i32 : i32, i32
  }
  func.func @transform_2(%arg0: i32, %arg1: i32) -> (i32, i32) {
    %c1_i32 = arith.constant 1 : i32
    %0 = arith.muli %arg0, %c1_i32 : i32
    %1 = arith.addi %0, %arg1 : i32
    %c0_i32 = arith.constant 0 : i32
    %c0_i32_0 = arith.constant 0 : i32
    return %1, %c0_i32 : i32, i32
  }
  func.func @transform_3(%arg0: i32, %arg1: i32) -> (i32, i32) {
    %c0_i32 = arith.constant 0 : i32
    %c0_i32_0 = arith.constant 0 : i32
    return %arg0, %c0_i32 : i32, i32
  }
}

</mosaic_0001>

<llo_original>
// kernel: tpu_custom_call.1
$region0: #{tpu_custom_call.1}
  #allocation0 [shape = 'u32[]', space=smem, size = 0x4, offset = 0x4, fixed_abs, tag = 'smem constant byte address 0x4 - core index']
  #allocation1 [shape = 'u32[144,128]{1,0:T(1,128)}', space=vmem, size = 0x12000, scoped, tag = 'internal scratch']
  #allocation2 [shape = 'f32[1,512]{1,0:T(1,128)}', space=vmem, size = 0x800, scoped, tag = 'scratch operand']
  %s0 = inlined_call_operand.hbm [shape: f32[1,512], index: 0, kind: input, shape index: {}]
  %s1 = inlined_call_operand.hbm [shape: f32[1,512], index: 1, kind: input, shape index: {}]
  %s2 = inlined_call_operand.vmem [shape: f32[1,512], index: 2, kind: input, shape index: {}]
  %s3 = inlined_call_operand.hbm [shape: f32[1,1], index: 3, kind: output, shape index: {}]
  %s4 = sld [smem:[#allocation0]]
  $region38: #{tpu_custom_call.1} parent=0
    _
  %s6 = ssub.s32 1, %s4
  %s7 = scalar_select 0, %s6, %s4
  $region1: #{tpu_custom_call.1} parent=0
    #allocation3 [shape = 'u8[2048]{0}', space=vmem, size = 0x800, scoped, tag = 'input window, operand 0, single buffered']
    #allocation4 [shape = 's32[1]{0}', space=sflag, size = 0x4, scoped, tag = 'scoped memory for tpu_custom_call.1']
    #allocation5 [shape = 's32[1]{0}', space=sflag, size = 0x4, scoped, tag = 'scoped memory for tpu_custom_call.1']
    #allocation6 [shape = 'u8[2048]{0}', space=vmem, size = 0x800, scoped, tag = 'input window, operand 1, single buffered']
    #allocation7 [shape = 's32[1]{0}', space=sflag, size = 0x4, scoped, tag = 'scoped memory for tpu_custom_call.1']
    #allocation8 [shape = 'u8[512]{0}', space=smem, size = 0x200, scoped, tag = 'output window, operand 0, single buffered']
    %8 = vsyncpa [#allocation4], 0
    %9 = vsyncpa [#allocation7], 0
    %10 = vsyncpa [#allocation5], 0
    // Predicated region
    $region2: #{tpu_custom_call.1} parent=1 // pred_check
      _
    $region3: #{tpu_custom_call.1} parent=1 // pred_check_branch
      %12 = sbr.rel (0) target = $region5
    $region4: #{tpu_custom_call.1} parent=1 // pred_region
      %s13 = sadd.s32 0, 0
      %s15 = ssub.s32 64, 64
      %16 = vsyncadd [#allocation4], %s15
      %s17 = smul.addr %s13, 4
      %s18 = smul.addr %s17, 16
      %s19 = scalar_lea.hbm %s0, %s18
      %s21 = sshll.u32 [#allocation3], 4
      %s22 = int_to_ptr.vmem [resolvable:$true] %s21
      %24 = dma.hbm_to_vmem [thread:$0]  %s19, 64, %s22, [#allocation4]
    $region5: #{tpu_custom_call.1} parent=1 // pred_fallthru
      _
    // Predicated region
    $region6: #{tpu_custom_call.1} parent=1 // pred_check
      _
    $region7: #{tpu_custom_call.1} parent=1 // pred_check_branch
      %26 = sbr.rel (0) target = $region9
    $region8: #{tpu_custom_call.1} parent=1 // pred_region
      %s27 = sadd.s32 0, 0
      %s29 = ssub.s32 64, 64
      %30 = vsyncadd [#allocation7], %s29
      %s31 = smul.addr %s27, 4
      %s32 = smul.addr %s31, 16
      %s33 = scalar_lea.hbm %s1, %s32
      %s35 = sshll.u32 [#allocation6], 4
      %s36 = int_to_ptr.vmem [resolvable:$true] %s35
      %38 = dma.hbm_to_vmem [thread:$0]  %s33, 64, %s36, [#allocation7]
    $region9: #{tpu_custom_call.1} parent=1 // pred_fallthru
      _
    // Predicated region
    $region10: #{tpu_custom_call.1} parent=1 // pred_check
      _
    $region11: #{tpu_custom_call.1} parent=1 // pred_check_branch
      %40 = sbr.rel (0) target = $region13
    $region12: #{tpu_custom_call.1} parent=1 // pred_region
      %s41 = sadd.s32 0, 0
      %p42 = scmp.lt.s32.totalorder %s41, 0
      %s43 = scalar_select %p42, %s41, 0
      %s44 = smul.addr %s43, 4
      %s45 = scalar_lea.vmem %s2, %s44
      %s46 = sadd.s32 0, 0
    $region13: #{tpu_custom_call.1} parent=1 // pred_fallthru
      _
    // Predicated region
    $region14: #{tpu_custom_call.1} parent=1 // pred_check
      _
    $region15: #{tpu_custom_call.1} parent=1 // pred_check_branch
      %48 = sbr.rel (0) target = $region17
    $region16: #{tpu_custom_call.1} parent=1 // pred_region
      %49 = dma.done [#allocation4], 64
    $region17: #{tpu_custom_call.1} parent=1 // pred_fallthru
      _
    // Predicated region
    $region18: #{tpu_custom_call.1} parent=1 // pred_check
      _
    $region19: #{tpu_custom_call.1} parent=1 // pred_check_branch
      %51 = sbr.rel (0) target = $region21
    $region20: #{tpu_custom_call.1} parent=1 // pred_region
      %52 = dma.done [#allocation7], 64
    $region21: #{tpu_custom_call.1} parent=1 // pred_fallthru
      _
    %s53 = sadd.s32 0, 0
    %p54 = scmp.lt.s32.totalorder %s53, 0
    %s55 = scalar_select %p54, %s53, 0
    %s56 = smul.addr %s55, 4
    %s57 = scalar_lea.vmem %s2, %s56
    %s58 = sadd.s32 0, 0
    %s59 = sadd.s32 0, 0
    %s60 = sadd.s32 0, 0
    %p61 = scmp.lt.s32.totalorder %s60, 0
    %s62 = scalar_select %p61, %s60, 0
    %s63 = smul.addr %s62, 4
    %s64 = scalar_lea.vmem %s2, %s63
    %s65 = sadd.s32 0, 0
    %p66 = scmp.eq.s32.totalorder 0, 0
    // Predicated region
    $region22: #{tpu_custom_call.1} parent=1 // pred_check
      %p67 = pneg %p66
    $region23: #{tpu_custom_call.1} parent=1 // pred_check_branch
      %69 = sbr.rel (%p67) target = $region25
    $region24: #{tpu_custom_call.1} parent=1 // pred_region
      %v70 = vlaneseq
      %vm71 = vcmp.ge.s32.totalorder %v70, 0
      %vm72 = vcmp.lt.s32.totalorder %v70, 512
      %vm73 = vmand %vm71, %vm72
      %74 = vst.msk [vmem:[#allocation2] sm:$0xf] %vm73, 0.0
    $region25: #{tpu_custom_call.1} parent=1 // pred_fallthru
      _
    %v75 = vld [vmem:[#allocation3] sm:$0xf]
    %v76 = vld [vmem:[#allocation6] sm:$0xf]
    %v77 = vld [vmem:[%s64] sm:$0xf]
    %v78 = vsub.f32 0.0, %v75
    %v79 = vmul.f32 %v78, 1.442695
    %v80 = vpow.pop %v79
    %v81 = vadd.f32 %v80, 1.0
    %v82 = vrcp.pop %v81
    %v83 = vmul.f32 1.0, %v82
    %v84 = vlog2.pop %v83
    %v85 = vmul.f32 %v84, 0.6931472
    %v86 = vmax.f32 %v85, -100.0
    %v87 = vsub.f32 1.0, %v83
    %v88 = vlog2.pop %v87
    %v89 = vmul.f32 %v88, 0.6931472
    %v90 = vmax.f32 %v89, -100.0
    %v91 = vsub.f32 %v86, %v90
    %v92 = vmul.f32 %v77, %v91
    %v93 = vadd.f32 %v90, %v92
    %v94 = vmul.f32 %v76, %v93
    %v95 = vld [vmem:[#allocation2] sm:$0xf]
    %v96 = vadd.f32 %v95, %v94
    %v97 = vlaneseq
    %vm98 = vcmp.ge.s32.totalorder %v97, 0
    %vm99 = vcmp.lt.s32.totalorder %v97, 512
    %vm100 = vmand %vm98, %vm99
    %101 = vst.msk [vmem:[#allocation2] sm:$0xf] %vm100, %v96
    // Predicated region
    $region26: #{tpu_custom_call.1} parent=1 // pred_check
      %p102 = pneg %p66
    $region27: #{tpu_custom_call.1} parent=1 // pred_check_branch
      %104 = sbr.rel (%p102) target = $region29
    $region28: #{tpu_custom_call.1} parent=1 // pred_region
      %v105 = vld [vmem:[#allocation2] sm:$0xf]
      %v107 = vlaneseq
      %v108 = vshrl.u32 %v107, 7
      %v109 = vsub.s32 0, %v108
      %v110 = vrot.slane %v105, %v109
      %v111 = vlaneseq
      %v112 = vshrl.u32 %v111, 7
      %v113 = vsub.s32 1, %v112
      %v114 = vrot.slane %v105, %v113
      %v115 = vlaneseq
      %v116 = vshrl.u32 %v115, 7
      %v117 = vsub.s32 2, %v116
      %v118 = vrot.slane %v105, %v117
      %v119 = vlaneseq
      %v120 = vshrl.u32 %v119, 7
      %v121 = vsub.s32 3, %v120
      %v122 = vrot.slane %v105, %v121
      %vm127 = vcmask 1040384
      %v128 = vsel %vm127, %v110, 0.0
      %v129 = vsel %vm127, %v114, 0.0
      %v130 = vadd.f32 %v128, %v129
      %v131 = vsel %vm127, %v118, 0.0
      %v132 = vadd.f32 %v130, %v131
      %v133 = vsel %vm127, %v122, 0.0
      %v134 = vadd.f32 %v132, %v133
      %135 = vadd.xlane.f32.xlu0 %v134
      %v136 = vpop.xlane.xlu0 %135
      %v137 = vrot.slane %v136, 4
      %v138 = vadd.f32 %v136, %v137
      %v139 = vrot.slane %v138, 2
      %v140 = vadd.f32 %v138, %v139
      %v141 = vrot.slane %v140, 1
      %v142 = vadd.f32 %v140, %v141
      %s143 = vtos %v142
      %s144 = smul.f32 %s143, -0.001953125
      %s145 = scalar_lea.smem [#allocation8], 0
      %146 = sst [smem:[%s145]] %s144
    $region29: #{tpu_custom_call.1} parent=1 // pred_fallthru
      _
    // Predicated region
    $region30: #{tpu_custom_call.1} parent=1 // pred_check
      _
    $region31: #{tpu_custom_call.1} parent=1 // pred_check_branch
      %148 = sbr.rel (0) target = $region33
    $region32: #{tpu_custom_call.1} parent=1 // pred_region
      %s150 = ssub.s32 16, 16
      %151 = vsyncadd [#allocation5], %s150
      %154 = dma.smem_to_hbm [#allocation8], 16, %s3, [#allocation5]
    $region33: #{tpu_custom_call.1} parent=1 // pred_fallthru
      _
    // Predicated region
    $region34: #{tpu_custom_call.1} parent=1 // pred_check
      _
    $region35: #{tpu_custom_call.1} parent=1 // pred_check_branch
      %156 = sbr.rel (0) target = $region37
    $region36: #{tpu_custom_call.1} parent=1 // pred_region
      %157 = dma.done [#allocation5], 16
    $region37: #{tpu_custom_call.1} parent=1 // pred_fallthru
      _
    %158 = sfence
    %159 = vsyncpa [#allocation4], 1
    %160 = vsyncpa [#allocation7], 1
    %161 = vsyncpa [#allocation5], 1

</llo_original>
